<compile_context>
chip_gen: v6e
topology: v6e:2x2x1
jax: 0.10.0
libtpu: 0.0.40
codegen_flags: <defaults>
</compile_context>

<pallas_src>
import functools

import jax
import jax.numpy as jnp
from jax import lax
from jax.experimental import pallas as pl
from jax.experimental.pallas import tpu as pltpu

LANES = 128
SUBLANES = 8
_CHUNK_ROWS = 512        # inner compute chunk (rows); multiple of 32
_BLOCK_BYTES = 4 << 20   # target HBM->VMEM block size per input per grid step


def _round_up(x, m):
    return ((x + m - 1) // m) * m


def _num_tensorcores_per_device():
    """2 on chips where one Pallas device spans two TensorCores (v4/v5p/v7x)."""
    try:
        kind = jax.devices()[0].device_kind.lower()
    except Exception:
        return 1
    return 2 if any(t in kind for t in ("v7", "v4", "v5p")) else 1


def _rmse_partial_kernel(yhat_ref, y_ref, out_ref, *, n_rows, block_rows,
                         chunk_rows, acc_rows, blocks_per_core):
    c = pl.program_id(0)          # TensorCore axis ("parallel")
    s = pl.program_id(1)          # reduction axis ("arbitrary")
    num_chunks = block_rows // chunk_rows
    groups = chunk_rows // acc_rows

    # Output block index is constant along s, so out_ref stays VMEM-resident
    # across the reduction axis and doubles as the accumulator.
    @pl.when(s == 0)
    def _():
        out_ref[...] = jnp.zeros_like(out_ref)

    # Un-clamped global row offset of this block: the ragged last block and
    # fully out-of-range (clamped idle-core) blocks take the masked path.
    row0 = (c * blocks_per_core + s) * block_rows

    def accumulate_chunk(r, masked):
        yh = yhat_ref[pl.ds(r, chunk_rows), :].astype(jnp.float32)
        yy = y_ref[pl.ds(r, chunk_rows), :].astype(jnp.float32)
        d = yh - yy
        sq = d * d
        if masked:
            rid = row0 + r + lax.broadcasted_iota(
                jnp.int32, (chunk_rows, LANES), 0)
            sq = jnp.where(rid < n_rows, sq, 0.0)
        # Reduce only the leading (vreg-group) axis: pure VPU adds into
        # acc_rows // 8 independent vreg rows (ILP on the add chain).
        out_ref[...] += jnp.sum(sq.reshape(groups, acc_rows, LANES), axis=0)

    def run_block(masked):
        if num_chunks == 1:
            accumulate_chunk(0, masked)
        else:
            def body(t, carry):
                accumulate_chunk(
                    pl.multiple_of(t * chunk_rows, chunk_rows), masked)
                return carry
            lax.fori_loop(0, num_chunks, body, 0)

    block_is_full = row0 + block_rows <= n_rows

    @pl.when(block_is_full)
    def _():
        run_block(masked=False)     # fast path: sub + mul + add only

    @pl.when(jnp.logical_not(block_is_full))
    def _():
        run_block(masked=True)      # masked path: ragged / idle-core blocks


def rmse_loss(yhat, y):
    assert yhat.shape == y.shape, "yhat and y must have the same shape"
    n = yhat.size
    yhat_flat = yhat.reshape(-1)
    y_flat = y.reshape(-1)

    n_rows = n // LANES
    n_main = n_rows * LANES

    # Sub-128-element tail: tiny plain-JAX sum (NO full-array jnp.pad copy).
    if n_main < n:
        dt = (yhat_flat[n_main:].astype(jnp.float32)
              - y_flat[n_main:].astype(jnp.float32))
        tail_sum = jnp.sum(dt * dt)
    else:
        tail_sum = jnp.zeros((), jnp.float32)

    if n_rows == 0:   # everything fit in the tail
        return jnp.sqrt(tail_sum / n)

    yhat2 = (yhat_flat[:n_main] if n_main < n else yhat_flat).reshape(n_rows, LANES)
    y2 = (y_flat[:n_main] if n_main < n else y_flat).reshape(n_rows, LANES)

    itemsize = jnp.dtype(yhat.dtype).itemsize
    # Packed-dtype minimum second-minor tile: 8 rows f32, 16 bf16/f16, 32 int8.
    sublane_mult = max(SUBLANES, 32 // max(itemsize, 1))

    # Largest block (multiple of the chunk size) within the per-input target.
    max_block_rows = max(
        _CHUNK_ROWS,
        (_BLOCK_BYTES // (LANES * itemsize)) // _CHUNK_ROWS * _CHUNK_ROWS)

    rounded_rows = _round_up(n_rows, sublane_mult)
    if rounded_rows <= max_block_rows:
        # Whole problem fits in one block.
        if rounded_rows > _CHUNK_ROWS:
            block_rows = _round_up(rounded_rows, _CHUNK_ROWS)
            chunk_rows = _CHUNK_ROWS
        else:
            block_rows = rounded_rows
            chunk_rows = rounded_rows
    else:
        block_rows = max_block_rows
        chunk_rows = _CHUNK_ROWS

    # Up to 4 independent accumulator vreg rows (breaks the serial add chain).
    if chunk_rows % 32 == 0:
        acc_rows = 32
    elif chunk_rows % 16 == 0:
        acc_rows = 16
    else:
        acc_rows = 8

    total_blocks = pl.cdiv(n_rows, block_rows)
    num_cores = _num_tensorcores_per_device() if total_blocks > 1 else 1
    blocks_per_core = pl.cdiv(total_blocks, num_cores)

    def in_index_map(c, s):
        # Clamp so the DMA never addresses a block past the array end; fully
        # out-of-range (idle-core) blocks are zero-masked in-kernel.
        return (jnp.minimum(c * blocks_per_core + s, total_blocks - 1), 0)

    kernel = functools.partial(
        _rmse_partial_kernel,
        n_rows=n_rows,
        block_rows=block_rows,
        chunk_rows=chunk_rows,
        acc_rows=acc_rows,
        blocks_per_core=blocks_per_core,
    )

    out_rows = num_cores * acc_rows
    partial_sums = pl.pallas_call(
        kernel,
        out_shape=jax.ShapeDtypeStruct((out_rows, LANES), jnp.float32),
        grid_spec=pltpu.PrefetchScalarGridSpec(
            num_scalar_prefetch=0,
            grid=(num_cores, blocks_per_core),
            in_specs=[
                pl.BlockSpec((block_rows, LANES), in_index_map),
                pl.BlockSpec((block_rows, LANES), in_index_map),
            ],
            out_specs=pl.BlockSpec((acc_rows, LANES), lambda c, s: (c, 0)),
        ),
        compiler_params=pltpu.CompilerParams(
            # On v7x, pltpu.CORE_PARALLEL can replace "parallel" on axis 0 if
            # megacore sharding does not kick in with the plain semantic.
            dimension_semantics=("parallel", "arbitrary"),
            # 2 inputs x 2 pipeline buffers x <=4 MiB blocks (<=16 MiB) plus
            # chunk temporaries + headroom; fits every generation's VMEM
            # (v7x: 64 MiB per TensorCore, v5e/v6e: 128 MiB physical).
            vmem_limit_bytes=32 * 1024 * 1024,
        ),
        cost_estimate=pl.CostEstimate(
            flops=3 * n_main,
            transcendentals=0,
            bytes_accessed=2 * n_main * itemsize + out_rows * LANES * 4,
        ),
    )(yhat2, y2)

    # Tiny cross-core / cross-lane combine + sqrt(mean) in plain JAX.
    total = jnp.sum(partial_sums) + tail_sum
    return jnp.sqrt(total / n)


if __name__ == "__main__":
    key = jax.random.PRNGKey(0)

    def check(shape, k):
        k1, k2 = jax.random.split(k)
        yhat = jax.random.normal(k1, shape, dtype=jnp.float32)
        y = jax.random.normal(k2, shape, dtype=jnp.float32)
        loss = rmse_loss(yhat, y)
        jax.block_until_ready(loss)
        ref = jnp.sqrt(jnp.mean((yhat - y) ** 2))
        assert jnp.allclose(loss, ref, rtol=1e-5, atol=1e-6), (shape, loss, ref)

    k0, k1, k2 = jax.random.split(key, 3)
    # NCHW-like shape matching the PyTorch usage.
    check((2, 4, 16, 16), k0)
    # Lane-unaligned size: exercises the masked ragged block + the <128 tail.
    check((3, 5, 7, 11), k1)
    # Larger case: exercises the chunked inner loop inside a bigger block.
    check((8, 4, 64, 64), k2)

    print("KERNEL_OK")
</pallas_src>

<mosaic_0001>
module attributes {stable_mosaic.version = 11 : i64} {
  func.func @_rmse_partial_kernel(%arg0: i32, %arg1: i32, %arg2: memref<16x128xf32, #tpu.memory_space<vmem>>, %arg3: memref<16x128xf32, #tpu.memory_space<vmem>>, %arg4: memref<16x128xf32, #tpu.memory_space<vmem>>) attributes {dimension_semantics = [#tpu.dimension_semantics<parallel>, #tpu.dimension_semantics<arbitrary>], iteration_bounds = array<i64: 1, 1>, scalar_prefetch = 0 : i64, scratch_operands = 0 : i64, tpu.core_type = #tpu.core_type<tc>, window_params = [{transform_indices = @transform_0, window_bounds = array<i64: 16, 128>}, {transform_indices = @transform_1, window_bounds = array<i64: 16, 128>}, {transform_indices = @transform_2, window_bounds = array<i64: 16, 128>}]} {
    %c0_i32 = arith.constant 0 : i32
    %0 = arith.cmpi eq, %arg1, %c0_i32 : i32
    %1 = arith.extui %0 : i1 to i32
    %c0_i32_0 = arith.constant 0 : i32
    %2 = arith.cmpi ne, %1, %c0_i32_0 : i32
    scf.if %2 {
      %cst = arith.constant 0.000000e+00 : f32
      %13 = vector.broadcast %cst : f32 to vector<16x128xf32>
      %c0 = arith.constant 0 : index
      %c0_5 = arith.constant 0 : index
      %14 = vector.load %arg4[%c0, %c0_5] : memref<16x128xf32, #tpu.memory_space<vmem>>, vector<16x128xf32>
      tpu.vector_store %arg4[%c0, %c0_5], %13 {strides = array<i32>} : memref<16x128xf32, #tpu.memory_space<vmem>>, vector<16x128xf32>,
    } else {
    }
    %c1_i32 = arith.constant 1 : i32
    %3 = arith.muli %arg0, %c1_i32 : i32
    %4 = arith.addi %3, %arg1 : i32
    %c16_i32 = arith.constant 16 : i32
    %5 = arith.muli %4, %c16_i32 : i32
    %c16_i32_1 = arith.constant 16 : i32
    %6 = arith.addi %5, %c16_i32_1 : i32
    %c16_i32_2 = arith.constant 16 : i32
    %7 = arith.cmpi sle, %6, %c16_i32_2 : i32
    %8 = arith.extui %7 : i1 to i32
    %c0_i32_3 = arith.constant 0 : i32
    %9 = arith.cmpi ne, %8, %c0_i32_3 : i32
    scf.if %9 {
      %c0 = arith.constant 0 : index
      %c0_5 = arith.constant 0 : index
      %13 = vector.load %arg2[%c0, %c0_5] : memref<16x128xf32, #tpu.memory_space<vmem>>, vector<16x128xf32>
      %c0_6 = arith.constant 0 : index
      %c0_7 = arith.constant 0 : index
      %14 = vector.load %arg3[%c0_6, %c0_7] : memref<16x128xf32, #tpu.memory_space<vmem>>, vector<16x128xf32>
      %15 = arith.subf %13, %14 : vector<16x128xf32>
      %16 = arith.mulf %15, %15 : vector<16x128xf32>
      %c0_8 = arith.constant 0 : index
      %c0_9 = arith.constant 0 : index
      %17 = vector.load %arg4[%c0_8, %c0_9] : memref<16x128xf32, #tpu.memory_space<vmem>>, vector<16x128xf32>
      %18 = vector.shape_cast %16 : vector<16x128xf32> to vector<1x16x128xf32>
      %cst = arith.constant dense<0.000000e+00> : vector<16x128xf32>
      %19 = vector.multi_reduction <add>, %18, %cst [0] : vector<1x16x128xf32> to vector<16x128xf32>
      %20 = arith.addf %17, %19 : vector<16x128xf32>
      %c0_10 = arith.constant 0 : index
      %c0_11 = arith.constant 0 : index
      %21 = vector.load %arg4[%c0_10, %c0_11] : memref<16x128xf32, #tpu.memory_space<vmem>>, vector<16x128xf32>
      tpu.vector_store %arg4[%c0_10, %c0_11], %20 {strides = array<i32>} : memref<16x128xf32, #tpu.memory_space<vmem>>, vector<16x128xf32>,
    } else {
    }
    %true = arith.constant true
    %10 = arith.xori %7, %true : i1
    %11 = arith.extui %10 : i1 to i32
    %c0_i32_4 = arith.constant 0 : i32
    %12 = arith.cmpi ne, %11, %c0_i32_4 : i32
    scf.if %12 {
      %c0 = arith.constant 0 : index
      %c0_5 = arith.constant 0 : index
      %13 = vector.load %arg2[%c0, %c0_5] : memref<16x128xf32, #tpu.memory_space<vmem>>, vector<16x128xf32>
      %c0_6 = arith.constant 0 : index
      %c0_7 = arith.constant 0 : index
      %14 = vector.load %arg3[%c0_6, %c0_7] : memref<16x128xf32, #tpu.memory_space<vmem>>, vector<16x128xf32>
      %15 = arith.subf %13, %14 : vector<16x128xf32>
      %16 = arith.mulf %15, %15 : vector<16x128xf32>
      %c0_i32_8 = arith.constant 0 : i32
      %17 = arith.addi %5, %c0_i32_8 : i32
      %18 = tpu.iota {dimensions = array<i32: 0>} : vector<16x128xi32>
      %19 = vector.broadcast %17 : i32 to vector<16x128xi32>
      %20 = arith.addi %19, %18 : vector<16x128xi32>
      %c16_i32_9 = arith.constant 16 : i32
      %21 = vector.broadcast %c16_i32_9 : i32 to vector<16x128xi32>
      %22 = arith.cmpi slt, %20, %21 : vector<16x128xi32>
      %cst = arith.constant 0.000000e+00 : f32
      %23 = vector.broadcast %cst : f32 to vector<16x128xf32>
      %24 = arith.select %22, %16, %23 : vector<16x128xi1>, vector<16x128xf32>
      %c0_10 = arith.constant 0 : index
      %c0_11 = arith.constant 0 : index
      %25 = vector.load %arg4[%c0_10, %c0_11] : memref<16x128xf32, #tpu.memory_space<vmem>>, vector<16x128xf32>
      %26 = vector.shape_cast %24 : vector<16x128xf32> to vector<1x16x128xf32>
      %cst_12 = arith.constant dense<0.000000e+00> : vector<16x128xf32>
      %27 = vector.multi_reduction <add>, %26, %cst_12 [0] : vector<1x16x128xf32> to vector<16x128xf32>
      %28 = arith.addf %25, %27 : vector<16x128xf32>
      %c0_13 = arith.constant 0 : index
      %c0_14 = arith.constant 0 : index
      %29 = vector.load %arg4[%c0_13, %c0_14] : memref<16x128xf32, #tpu.memory_space<vmem>>, vector<16x128xf32>
      tpu.vector_store %arg4[%c0_13, %c0_14], %28 {strides = array<i32>} : memref<16x128xf32, #tpu.memory_space<vmem>>, vector<16x128xf32>,
    } else {
    }
    return
  }
  func.func @transform_0(%arg0: i32, %arg1: i32) -> (i32, i32) {
    %c1_i32 = arith.constant 1 : i32
    %0 = arith.muli %arg0, %c1_i32 : i32
    %1 = arith.addi %0, %arg1 : i32
    %c0_i32 = arith.constant 0 : i32
    %2 = arith.minsi %1, %c0_i32 : i32
    %c0_i32_0 = arith.constant 0 : i32
    %c0_i32_1 = arith.constant 0 : i32
    return %2, %c0_i32_0 : i32, i32
  }
  func.func @transform_1(%arg0: i32, %arg1: i32) -> (i32, i32) {
    %c1_i32 = arith.constant 1 : i32
    %0 = arith.muli %arg0, %c1_i32 : i32
    %1 = arith.addi %0, %arg1 : i32
    %c0_i32 = arith.constant 0 : i32
    %2 = arith.minsi %1, %c0_i32 : i32
    %c0_i32_0 = arith.constant 0 : i32
    %c0_i32_1 = arith.constant 0 : i32
    return %2, %c0_i32_0 : i32, i32
  }
  func.func @transform_2(%arg0: i32, %arg1: i32) -> (i32, i32) {
    %c0_i32 = arith.constant 0 : i32
    %c0_i32_0 = arith.constant 0 : i32
    return %arg0, %c0_i32 : i32, i32
  }
}

</mosaic_0001>

<llo_original>
// kernel: tpu_custom_call.1
$region0: #{tpu_custom_call.1}
  #allocation0 [shape = 'u32[]', space=smem, size = 0x4, offset = 0x4, fixed_abs, tag = 'smem constant byte address 0x4 - core index']
  #allocation1 [shape = 'u32[144,128]{1,0:T(1,128)}', space=vmem, size = 0x12000, scoped, tag = 'internal scratch']
  %s0 = inlined_call_operand.hbm [shape: f32[16,128], index: 0, kind: input, shape index: {}]
  %s1 = inlined_call_operand.hbm [shape: f32[16,128], index: 1, kind: input, shape index: {}]
  %s2 = inlined_call_operand.hbm [shape: f32[16,128], index: 2, kind: output, shape index: {}]
  %s3 = sld [smem:[#allocation0]]
  $region38: #{tpu_custom_call.1} parent=0
    _
  %s5 = ssub.s32 1, %s3
  %s6 = scalar_select 0, %s5, %s3
  $region1: #{tpu_custom_call.1} parent=0
    #allocation2 [shape = 'u8[8192]{0}', space=vmem, size = 0x2000, scoped, tag = 'input window, operand 0, single buffered']
    #allocation3 [shape = 's32[1]{0}', space=sflag, size = 0x4, scoped, tag = 'scoped memory for tpu_custom_call.1']
    #allocation4 [shape = 's32[1]{0}', space=sflag, size = 0x4, scoped, tag = 'scoped memory for tpu_custom_call.1']
    #allocation5 [shape = 'u8[8192]{0}', space=vmem, size = 0x2000, scoped, tag = 'input window, operand 1, single buffered']
    #allocation6 [shape = 's32[1]{0}', space=sflag, size = 0x4, scoped, tag = 'scoped memory for tpu_custom_call.1']
    #allocation7 [shape = 'u8[8192]{0}', space=vmem, size = 0x2000, scoped, tag = 'output window, operand 0, single buffered']
    %7 = vsyncpa [#allocation3], 0
    %8 = vsyncpa [#allocation6], 0
    %9 = vsyncpa [#allocation4], 0
    // Predicated region
    $region2: #{tpu_custom_call.1} parent=1 // pred_check
      _
    $region3: #{tpu_custom_call.1} parent=1 // pred_check_branch
      %11 = sbr.rel (0) target = $region5
    $region4: #{tpu_custom_call.1} parent=1 // pred_region
      %s12 = sadd.s32 0, 0
      %p13 = scmp.lt.s32.totalorder %s12, 0
      %s14 = scalar_select %p13, %s12, 0
      %s15 = smul.u32 2, %s14
      %s17 = ssub.s32 256, 256
      %18 = vsyncadd [#allocation3], %s17
      %s19 = smul.addr %s15, 128
      %s20 = scalar_lea.hbm %s0, %s19
      %s21 = sshll.u32 [#allocation2], 4
      %s22 = int_to_ptr.vmem [resolvable:$true] %s21
      %27 = dma.hbm_to_vmem [thread:$0]  %s20, 256, %s22, [#allocation3], 128, 128, 8
    $region5: #{tpu_custom_call.1} parent=1 // pred_fallthru
      _
    // Predicated region
    $region6: #{tpu_custom_call.1} parent=1 // pred_check
      _
    $region7: #{tpu_custom_call.1} parent=1 // pred_check_branch
      %29 = sbr.rel (0) target = $region9
    $region8: #{tpu_custom_call.1} parent=1 // pred_region
      %s30 = sadd.s32 0, 0
      %p31 = scmp.lt.s32.totalorder %s30, 0
      %s32 = scalar_select %p31, %s30, 0
      %s33 = smul.u32 2, %s32
      %s35 = ssub.s32 256, 256
      %36 = vsyncadd [#allocation6], %s35
      %s37 = smul.addr %s33, 128
      %s38 = scalar_lea.hbm %s1, %s37
      %s39 = sshll.u32 [#allocation5], 4
      %s40 = int_to_ptr.vmem [resolvable:$true] %s39
      %45 = dma.hbm_to_vmem [thread:$0]  %s38, 256, %s40, [#allocation6], 128, 128, 8
    $region9: #{tpu_custom_call.1} parent=1 // pred_fallthru
      _
    // Predicated region
    $region10: #{tpu_custom_call.1} parent=1 // pred_check
      _
    $region11: #{tpu_custom_call.1} parent=1 // pred_check_branch
      %47 = sbr.rel (0) target = $region13
    $region12: #{tpu_custom_call.1} parent=1 // pred_region
      %48 = dma.done [#allocation3], 256
    $region13: #{tpu_custom_call.1} parent=1 // pred_fallthru
      _
    // Predicated region
    $region14: #{tpu_custom_call.1} parent=1 // pred_check
      _
    $region15: #{tpu_custom_call.1} parent=1 // pred_check_branch
      %50 = sbr.rel (0) target = $region17
    $region16: #{tpu_custom_call.1} parent=1 // pred_region
      %51 = dma.done [#allocation6], 256
    $region17: #{tpu_custom_call.1} parent=1 // pred_fallthru
      _
    %s52 = sadd.s32 0, 0
    %p53 = scmp.lt.s32.totalorder %s52, 0
    %s54 = scalar_select %p53, %s52, 0
    %s55 = smul.u32 2, %s54
    %s56 = sadd.s32 0, 0
    %p57 = scmp.lt.s32.totalorder %s56, 0
    %s58 = scalar_select %p57, %s56, 0
    %s59 = smul.u32 2, %s58
    %p60 = scmp.eq.s32.totalorder 0, 0
    // Predicated region
    $region18: #{tpu_custom_call.1} parent=1 // pred_check
      %p61 = pneg %p60
    $region19: #{tpu_custom_call.1} parent=1 // pred_check_branch
      %63 = sbr.rel (%p61) target = $region21
    $region20: #{tpu_custom_call.1} parent=1 // pred_region
      %64 = vst [vmem:[#allocation7] sm:$0xff] 0.0
      %65 = vst [vmem:[#allocation7 + $0x8] sm:$0xff] 0.0
    $region21: #{tpu_custom_call.1} parent=1 // pred_fallthru
      _
    %s66 = sadd.s32 0, 0
    %s67 = smul.u32 %s66, 16
    %s68 = sadd.s32 %s67, 16
    %p69 = scmp.le.s32.totalorder %s68, 16
    // Predicated region
    $region22: #{tpu_custom_call.1} parent=1 // pred_check
      %p70 = pneg %p69
    $region23: #{tpu_custom_call.1} parent=1 // pred_check_branch
      %72 = sbr.rel (%p70) target = $region25
    $region24: #{tpu_custom_call.1} parent=1 // pred_region
      %v73 = vld [vmem:[#allocation2] sm:$0xff]
      %v74 = vld [vmem:[#allocation2 + $0x8] sm:$0xff]
      %v75 = vld [vmem:[#allocation5] sm:$0xff]
      %v76 = vld [vmem:[#allocation5 + $0x8] sm:$0xff]
      %v77 = vsub.f32 %v73, %v75
      %v78 = vsub.f32 %v74, %v76
      %v79 = vmul.f32 %v77, %v77
      %v80 = vmul.f32 %v78, %v78
      %v81 = vld [vmem:[#allocation7] sm:$0xff]
      %v82 = vld [vmem:[#allocation7 + $0x8] sm:$0xff]
      %v83 = vadd.f32 %v79, 0.0
      %v84 = vadd.f32 %v80, 0.0
      %v85 = vadd.f32 %v81, %v83
      %v86 = vadd.f32 %v82, %v84
      %87 = vst [vmem:[#allocation7] sm:$0xff] %v85
      %88 = vst [vmem:[#allocation7 + $0x8] sm:$0xff] %v86
    $region25: #{tpu_custom_call.1} parent=1 // pred_fallthru
      _
    %p89 = scmp.gt.s32.totalorder %s68, 16
    // Predicated region
    $region26: #{tpu_custom_call.1} parent=1 // pred_check
      %p90 = pneg %p89
    $region27: #{tpu_custom_call.1} parent=1 // pred_check_branch
      %92 = sbr.rel (%p90) target = $region29
    $region28: #{tpu_custom_call.1} parent=1 // pred_region
      %v93 = vld [vmem:[#allocation2] sm:$0xff]
      %v94 = vld [vmem:[#allocation2 + $0x8] sm:$0xff]
      %v95 = vld [vmem:[#allocation5] sm:$0xff]
      %v96 = vld [vmem:[#allocation5 + $0x8] sm:$0xff]
      %v97 = vsub.f32 %v93, %v95
      %v98 = vsub.f32 %v94, %v96
      %v99 = vmul.f32 %v97, %v97
      %v100 = vmul.f32 %v98, %v98
      %v101 = vlaneseq
      %v102 = vshrl.u32 %v101, 7
      %v103 = vadd.s32 %v102, 8
      %v104 = vstv %s67
      %v105 = vadd.s32 %v104, %v102
      %v106 = vadd.s32 %v104, %v103
      %vm107 = vcmp.lt.s32.totalorder %v105, 16
      %vm108 = vcmp.lt.s32.totalorder %v106, 16
      %v109 = vsel %vm107, %v99, 0.0
      %v110 = vsel %vm108, %v100, 0.0
      %v111 = vld [vmem:[#allocation7] sm:$0xff]
      %v112 = vld [vmem:[#allocation7 + $0x8] sm:$0xff]
      %v113 = vadd.f32 %v109, 0.0
      %v114 = vadd.f32 %v110, 0.0
      %v115 = vadd.f32 %v111, %v113
      %v116 = vadd.f32 %v112, %v114
      %117 = vst [vmem:[#allocation7] sm:$0xff] %v115
      %118 = vst [vmem:[#allocation7 + $0x8] sm:$0xff] %v116
    $region29: #{tpu_custom_call.1} parent=1 // pred_fallthru
      _
    // Predicated region
    $region30: #{tpu_custom_call.1} parent=1 // pred_check
      _
    $region31: #{tpu_custom_call.1} parent=1 // pred_check_branch
      %120 = sbr.rel (0) target = $region33
    $region32: #{tpu_custom_call.1} parent=1 // pred_region
      %s122 = ssub.s32 256, 256
      %123 = vsyncadd [#allocation4], %s122
      %s124 = sshll.u32 [#allocation7], 4
      %s125 = int_to_ptr.vmem [resolvable:$true] %s124
      %130 = dma.vmem_to_hbm [thread:$0]  %s125, 256, %s2, [#allocation4], 128, 128, 8
    $region33: #{tpu_custom_call.1} parent=1 // pred_fallthru
      _
    // Predicated region
    $region34: #{tpu_custom_call.1} parent=1 // pred_check
      _
    $region35: #{tpu_custom_call.1} parent=1 // pred_check_branch
      %132 = sbr.rel (0) target = $region37
    $region36: #{tpu_custom_call.1} parent=1 // pred_region
      %133 = dma.done [#allocation4], 256
    $region37: #{tpu_custom_call.1} parent=1 // pred_fallthru
      _
    %134 = vsyncpa [#allocation3], 1
    %135 = vsyncpa [#allocation6], 1
    %136 = vsyncpa [#allocation4], 1

</llo_original>
